<compile_context>
chip_gen: v7x
topology: tpu7x:2x2x1
jax: 0.10.0
libtpu: 0.0.40
codegen_flags: <defaults>
</compile_context>

<pallas_src>
import functools
import math

import numpy as np
import jax
import jax.numpy as jnp
from jax.experimental import pallas as pl
from jax.experimental.pallas import tpu as pltpu


def _cdiv(a, b):
    return -(-a // b)


def _round_up(a, b):
    return _cdiv(a, b) * b


# ----------------------------- Pallas kernel --------------------------------
def _relpos_kernel(q_ref, c_ref, o_ref, *, bk):
    # q_ref: (TM, D)   c_ref: (2*Bk*D, K)   o_ref: (TM, K)
    tm, d = q_ref.shape
    k = o_ref.shape[-1]

    # Cast the q tile once to the MXU operand dtype (bf16 when input is f32).
    qv = q_ref[...].astype(c_ref.dtype)

    # Tile-local row index -> (y, x).  The wrapper guarantees TM % Bk**2 == 0,
    # so rows = b*Bk**2 + x*Bk + y reduces to the tile-local pattern (no
    # program_id math, identical for every grid step).
    rows = jax.lax.broadcasted_iota(jnp.int32, (tm, 1), 0)
    if (bk & (bk - 1)) == 0:                      # power of two: and/shift
        shift = bk.bit_length() - 1
        y = rows & (bk - 1)
        x = (rows >> shift) & (bk - 1)
    else:
        y = rows % bk
        x = (rows // bk) % bk

    # Per-group masked-q matmuls, f32 accumulation.  For each row exactly one
    # width group (y) and one height group (x) is non-zero, so the sum of the
    # 2*Bk partial products is exactly the width + height logits.
    # (Unrolled: fine for Bk <= 8; switch to fori_loop + pl.ds for larger Bk.)
    acc = jnp.zeros((tm, k), jnp.float32)
    for g in range(bk):
        qw = jnp.where(y == g, qv, 0)             # mask is only D lanes wide
        acc = acc + jnp.dot(qw, c_ref[g * d:(g + 1) * d, :],
                            preferred_element_type=jnp.float32)
        qh = jnp.where(x == g, qv, 0)
        acc = acc + jnp.dot(qh, c_ref[(bk + g) * d:(bk + g + 1) * d, :],
                            preferred_element_type=jnp.float32)

    o_ref[...] = acc.astype(o_ref.dtype)


# ------------------------------- wrapper -------------------------------------
def _build_projection(rel_height, rel_width, block_size, dtype):
    """(2*Bk*D, K) constant: rel_to_abs gather pre-folded, stacked per group.

    Rows [g*D, (g+1)*D)        = rel_width table a row with y == g needs.
    Rows [(Bk+g)*D, (Bk+g+1)*D) = rel_height table a row with x == g needs.
    Pure function of (rel_height, rel_width, block_size); cheap gathers, can
    be cached by the caller if the rel_k parameters are frozen.
    """
    M, D = rel_width.shape
    R = (M + 1) // 2
    K = R * R
    Bk = block_size

    ii, jj = np.meshgrid(np.arange(R), np.arange(R), indexing="ij")
    ii = ii.reshape(-1)                       # (K,)  i index of out col i*R+j
    jj = jj.reshape(-1)                       # (K,)  j index
    g = np.arange(Bk)[:, None]                # (Bk, 1)
    gw = jj[None, :] + (R - 1) - g            # (Bk, K) rel_width rows, keyed by y
    gh = ii[None, :] + (R - 1) - g            # (Bk, K) rel_height rows, keyed by x

    def gather(rel_k, idx):
        tbl = jnp.take(rel_k, jnp.asarray(idx), axis=0)           # (Bk, K, D)
        return jnp.transpose(tbl, (0, 2, 1)).reshape(Bk * D, K)   # (Bk*D, K)

    c = jnp.concatenate([gather(rel_width, gw),
                         gather(rel_height, gh)], axis=0)         # (2*Bk*D, K)
    return c.astype(dtype)


def rel_pos_emb_forward(q, rel_height, rel_width, block_size, *,
                        tile_rows=1024, use_bf16_mxu=True):
    """q: (B, block_size**2, dim_head) -> (B, block_size**2, rel_size**2)."""
    B, N, D = q.shape
    Bk = block_size
    M = rel_height.shape[0]
    R = (M + 1) // 2
    K = R * R
    assert N == Bk * Bk
    assert rel_width.shape == (M, D) and rel_height.shape == (M, D)
    assert R >= Bk, "rel_size must be >= block_size (as in HaloAttention)"
    out_dtype = q.dtype

    # bf16 MXU operands (f32 accumulation) when the caller passes f32.
    mxu_dtype = jnp.bfloat16 if (use_bf16_mxu and q.dtype == jnp.float32) else q.dtype
    c = _build_projection(rel_height, rel_width, Bk, mxu_dtype)   # (2*Bk*D, K)

    # Row tiling: TM multiple of lcm(8, Bk**2); >= 2 grid steps when possible
    # (keeps both v7x TensorCores busy on medium row counts).
    period = Bk * Bk
    align = 8 * period // math.gcd(8, period)
    rtot = B * N
    cap = max(align, (tile_rows // align) * align)
    if rtot <= align:
        tm = align
    else:
        steps = max(2, _cdiv(rtot, cap))
        tm = min(cap, _round_up(_cdiv(rtot, steps), align))
    assert tm % period == 0
    rpad = _round_up(rtot, tm)
    grid = rpad // tm

    q2 = q.reshape(rtot, D)
    if rpad != rtot:
        # Only triggers when the tile doesn't divide the row count (rare for
        # HaloAttention shapes); garbage rows are sliced off below.
        q2 = jnp.pad(q2, ((0, rpad - rtot), (0, 0)))

    kernel = functools.partial(_relpos_kernel, bk=Bk)
    out = pl.pallas_call(
        kernel,
        out_shape=jax.ShapeDtypeStruct((rpad, K), out_dtype),
        grid=(grid,),
        in_specs=[
            pl.BlockSpec((tm, D), lambda i: (i, 0)),
            pl.BlockSpec((2 * Bk * D, K), lambda i: (0, 0)),   # resident constant
        ],
        out_specs=pl.BlockSpec((tm, K), lambda i: (i, 0)),
        compiler_params=pltpu.CompilerParams(
            dimension_semantics=("parallel",),
            vmem_limit_bytes=32 * 1024 * 1024),
    )(q2, c)

    if rpad != rtot:
        out = out[:rtot]
    return out.reshape(B, N, K)


# ---------------- pure-JAX reference (mirrors the PyTorch code) ----------------
def _ref_rel_to_abs(x):
    b, l, m = x.shape
    r = (m + 1) // 2
    x = jnp.concatenate([x, jnp.zeros((b, l, 1), x.dtype)], axis=2)
    flat_x = x.reshape(b, l * (m + 1))
    flat_x = jnp.concatenate([flat_x, jnp.zeros((b, m - l), x.dtype)], axis=1)
    final = flat_x.reshape(b, l + 1, m)
    return final[:, :l, -r:]


def _ref_relative_logits_1d(q, rel_k):
    b, h, w, _ = q.shape
    r = (rel_k.shape[0] + 1) // 2
    logits = jnp.einsum('bxyd,rd->bxyr', q, rel_k)
    logits = logits.reshape(b * h, w, -1)
    logits = _ref_rel_to_abs(logits)
    logits = logits.reshape(b, h, w, r)
    return jnp.broadcast_to(logits[:, :, None, :, :], (b, h, r, w, r))


def rel_pos_emb_ref(q, rel_height, rel_width, block):
    B, N, D = q.shape
    q4 = q.reshape(B, block, block, D)
    w_l = _ref_relative_logits_1d(q4, rel_width)                 # b x i y j
    w_l = w_l.transpose(0, 1, 3, 2, 4).reshape(B, N, -1)         # b (x y) (i j)
    h_l = _ref_relative_logits_1d(q4.transpose(0, 2, 1, 3), rel_height)
    h_l = h_l.transpose(0, 3, 1, 4, 2).reshape(B, N, -1)         # b (y x) (j i)
    return w_l + h_l


if __name__ == "__main__":
    block_size = 4
    rel_size = 6          # e.g. block_size + 2*halo with halo=1
    dim_head = 32
    scale = dim_head ** (-0.5)

    key = jax.random.PRNGKey(0)
    k1, k2, k3, k4 = jax.random.split(key, 4)
    rel_height = jax.random.normal(k1, (rel_size * 2 - 1, dim_head), jnp.float32) * scale
    rel_width = jax.random.normal(k2, (rel_size * 2 - 1, dim_head), jnp.float32) * scale

    # Kernel uses bf16 MXU operands with f32 accumulation, so compare against
    # the reference evaluated on bf16-rounded inputs (products of bf16 values
    # are exact in f32; only accumulation order differs).
    def bf16_round(x):
        return x.astype(jnp.bfloat16).astype(jnp.float32)

    # Test 1: small shape matching the module spec (2-step grid, tm=16).
    batch = 2
    q = jax.random.normal(k3, (batch, block_size * block_size, dim_head), jnp.float32)
    out = jax.block_until_ready(rel_pos_emb_forward(q, rel_height, rel_width, block_size))
    ref = rel_pos_emb_ref(bf16_round(q), bf16_round(rel_height),
                          bf16_round(rel_width), block_size)
    assert out.shape == (batch, block_size ** 2, rel_size ** 2), out.shape
    err1 = float(jnp.max(jnp.abs(out - ref)))

    # Test 2: larger flattened-row count (multi-step grid, no row padding).
    batch2 = 40   # 40*16 = 640 rows -> tm=320, grid=(2,)
    q2 = jax.random.normal(k4, (batch2, block_size * block_size, dim_head), jnp.float32)
    out2 = jax.block_until_ready(rel_pos_emb_forward(q2, rel_height, rel_width, block_size))
    ref2 = rel_pos_emb_ref(bf16_round(q2), bf16_round(rel_height),
                           bf16_round(rel_width), block_size)
    err2 = float(jnp.max(jnp.abs(out2 - ref2)))

    if err1 > 5e-3 or err2 > 5e-3:
        raise SystemExit(f"mismatch: max abs err = {err1}, {err2}")
    print("KERNEL_OK")
</pallas_src>

<mosaic_0001>
module attributes {stable_mosaic.version = 11 : i64} {
  func.func @_relpos_kernel(%arg0: i32, %arg1: memref<16x32xf32, #tpu.memory_space<vmem>>, %arg2: memref<256x36xbf16, #tpu.memory_space<vmem>>, %arg3: memref<16x36xf32, #tpu.memory_space<vmem>>) attributes {dimension_semantics = [#tpu.dimension_semantics<parallel>], iteration_bounds = array<i64: 2>, scalar_prefetch = 0 : i64, scratch_operands = 0 : i64, tpu.core_type = #tpu.core_type<tc>, window_params = [{transform_indices = @transform_0, window_bounds = array<i64: 16, 32>}, {pipeline_mode = #tpu.pipeline_mode<synchronous>, transform_indices = @transform_1, window_bounds = array<i64: 256, 36>}, {transform_indices = @transform_2, window_bounds = array<i64: 16, 36>}]} {
    %c0 = arith.constant 0 : index
    %c0_0 = arith.constant 0 : index
    %0 = vector.load %arg1[%c0, %c0_0] : memref<16x32xf32, #tpu.memory_space<vmem>>, vector<16x32xf32>
    %1 = arith.truncf %0 : vector<16x32xf32> to vector<16x32xbf16>
    %2 = tpu.iota {dimensions = array<i32: 0>} : vector<16x1xi32>
    %c3_i32 = arith.constant 3 : i32
    %3 = vector.broadcast %c3_i32 : i32 to vector<16x1xi32>
    %4 = arith.andi %2, %3 : vector<16x1xi32>
    %c2_i32 = arith.constant 2 : i32
    %5 = vector.broadcast %c2_i32 : i32 to vector<16x1xi32>
    %6 = arith.shrsi %2, %5 : vector<16x1xi32>
    %c3_i32_1 = arith.constant 3 : i32
    %7 = vector.broadcast %c3_i32_1 : i32 to vector<16x1xi32>
    %8 = arith.andi %6, %7 : vector<16x1xi32>
    %cst = arith.constant 0.000000e+00 : f32
    %9 = vector.broadcast %cst : f32 to vector<16x36xf32>
    %c0_i32 = arith.constant 0 : i32
    %10 = vector.broadcast %c0_i32 : i32 to vector<16x1xi32>
    %11 = arith.cmpi eq, %4, %10 : vector<16x1xi32>
    %c0_i32_2 = arith.constant 0 : i32
    %12 = arith.sitofp %c0_i32_2 : i32 to bf16
    %13 = vector.shape_cast %11 : vector<16x1xi1> to vector<16x1xi1>
    %14 = vector.broadcast %13 : vector<16x1xi1> to vector<16x32xi1>
    %15 = vector.broadcast %12 : bf16 to vector<16x32xbf16>
    %16 = arith.select %14, %1, %15 : vector<16x32xi1>, vector<16x32xbf16>
    %c0_3 = arith.constant 0 : index
    %c0_4 = arith.constant 0 : index
    %17 = vector.load %arg2[%c0_3, %c0_4] : memref<256x36xbf16, #tpu.memory_space<vmem>>, vector<32x36xbf16>
    %cst_5 = arith.constant dense<0.000000e+00> : vector<16x36xf32>
    %18 = tpu.matmul %16, %17, %cst_5 {dimension_numbers = #tpu.dot_dimension_numbers<[1], [0], [0], [1], [0, 0, 1, 1], [], []>} : vector<16x32xbf16>, vector<32x36xbf16>, vector<16x36xf32> -> vector<16x36xf32>
    %19 = arith.addf %9, %18 : vector<16x36xf32>
    %c0_i32_6 = arith.constant 0 : i32
    %20 = vector.broadcast %c0_i32_6 : i32 to vector<16x1xi32>
    %21 = arith.cmpi eq, %8, %20 : vector<16x1xi32>
    %c0_i32_7 = arith.constant 0 : i32
    %22 = arith.sitofp %c0_i32_7 : i32 to bf16
    %23 = vector.shape_cast %21 : vector<16x1xi1> to vector<16x1xi1>
    %24 = vector.broadcast %23 : vector<16x1xi1> to vector<16x32xi1>
    %25 = vector.broadcast %22 : bf16 to vector<16x32xbf16>
    %26 = arith.select %24, %1, %25 : vector<16x32xi1>, vector<16x32xbf16>
    %c128 = arith.constant 128 : index
    %c0_8 = arith.constant 0 : index
    %27 = vector.load %arg2[%c128, %c0_8] : memref<256x36xbf16, #tpu.memory_space<vmem>>, vector<32x36xbf16>
    %cst_9 = arith.constant dense<0.000000e+00> : vector<16x36xf32>
    %28 = tpu.matmul %26, %27, %cst_9 {dimension_numbers = #tpu.dot_dimension_numbers<[1], [0], [0], [1], [0, 0, 1, 1], [], []>} : vector<16x32xbf16>, vector<32x36xbf16>, vector<16x36xf32> -> vector<16x36xf32>
    %29 = arith.addf %19, %28 : vector<16x36xf32>
    %c1_i32 = arith.constant 1 : i32
    %30 = vector.broadcast %c1_i32 : i32 to vector<16x1xi32>
    %31 = arith.cmpi eq, %4, %30 : vector<16x1xi32>
    %c0_i32_10 = arith.constant 0 : i32
    %32 = arith.sitofp %c0_i32_10 : i32 to bf16
    %33 = vector.shape_cast %31 : vector<16x1xi1> to vector<16x1xi1>
    %34 = vector.broadcast %33 : vector<16x1xi1> to vector<16x32xi1>
    %35 = vector.broadcast %32 : bf16 to vector<16x32xbf16>
    %36 = arith.select %34, %1, %35 : vector<16x32xi1>, vector<16x32xbf16>
    %c32 = arith.constant 32 : index
    %c0_11 = arith.constant 0 : index
    %37 = vector.load %arg2[%c32, %c0_11] : memref<256x36xbf16, #tpu.memory_space<vmem>>, vector<32x36xbf16>
    %cst_12 = arith.constant dense<0.000000e+00> : vector<16x36xf32>
    %38 = tpu.matmul %36, %37, %cst_12 {dimension_numbers = #tpu.dot_dimension_numbers<[1], [0], [0], [1], [0, 0, 1, 1], [], []>} : vector<16x32xbf16>, vector<32x36xbf16>, vector<16x36xf32> -> vector<16x36xf32>
    %39 = arith.addf %29, %38 : vector<16x36xf32>
    %c1_i32_13 = arith.constant 1 : i32
    %40 = vector.broadcast %c1_i32_13 : i32 to vector<16x1xi32>
    %41 = arith.cmpi eq, %8, %40 : vector<16x1xi32>
    %c0_i32_14 = arith.constant 0 : i32
    %42 = arith.sitofp %c0_i32_14 : i32 to bf16
    %43 = vector.shape_cast %41 : vector<16x1xi1> to vector<16x1xi1>
    %44 = vector.broadcast %43 : vector<16x1xi1> to vector<16x32xi1>
    %45 = vector.broadcast %42 : bf16 to vector<16x32xbf16>
    %46 = arith.select %44, %1, %45 : vector<16x32xi1>, vector<16x32xbf16>
    %c160 = arith.constant 160 : index
    %c0_15 = arith.constant 0 : index
    %47 = vector.load %arg2[%c160, %c0_15] : memref<256x36xbf16, #tpu.memory_space<vmem>>, vector<32x36xbf16>
    %cst_16 = arith.constant dense<0.000000e+00> : vector<16x36xf32>
    %48 = tpu.matmul %46, %47, %cst_16 {dimension_numbers = #tpu.dot_dimension_numbers<[1], [0], [0], [1], [0, 0, 1, 1], [], []>} : vector<16x32xbf16>, vector<32x36xbf16>, vector<16x36xf32> -> vector<16x36xf32>
    %49 = arith.addf %39, %48 : vector<16x36xf32>
    %c2_i32_17 = arith.constant 2 : i32
    %50 = vector.broadcast %c2_i32_17 : i32 to vector<16x1xi32>
    %51 = arith.cmpi eq, %4, %50 : vector<16x1xi32>
    %c0_i32_18 = arith.constant 0 : i32
    %52 = arith.sitofp %c0_i32_18 : i32 to bf16
    %53 = vector.shape_cast %51 : vector<16x1xi1> to vector<16x1xi1>
    %54 = vector.broadcast %53 : vector<16x1xi1> to vector<16x32xi1>
    %55 = vector.broadcast %52 : bf16 to vector<16x32xbf16>
    %56 = arith.select %54, %1, %55 : vector<16x32xi1>, vector<16x32xbf16>
    %c64 = arith.constant 64 : index
    %c0_19 = arith.constant 0 : index
    %57 = vector.load %arg2[%c64, %c0_19] : memref<256x36xbf16, #tpu.memory_space<vmem>>, vector<32x36xbf16>
    %cst_20 = arith.constant dense<0.000000e+00> : vector<16x36xf32>
    %58 = tpu.matmul %56, %57, %cst_20 {dimension_numbers = #tpu.dot_dimension_numbers<[1], [0], [0], [1], [0, 0, 1, 1], [], []>} : vector<16x32xbf16>, vector<32x36xbf16>, vector<16x36xf32> -> vector<16x36xf32>
    %59 = arith.addf %49, %58 : vector<16x36xf32>
    %c2_i32_21 = arith.constant 2 : i32
    %60 = vector.broadcast %c2_i32_21 : i32 to vector<16x1xi32>
    %61 = arith.cmpi eq, %8, %60 : vector<16x1xi32>
    %c0_i32_22 = arith.constant 0 : i32
    %62 = arith.sitofp %c0_i32_22 : i32 to bf16
    %63 = vector.shape_cast %61 : vector<16x1xi1> to vector<16x1xi1>
    %64 = vector.broadcast %63 : vector<16x1xi1> to vector<16x32xi1>
    %65 = vector.broadcast %62 : bf16 to vector<16x32xbf16>
    %66 = arith.select %64, %1, %65 : vector<16x32xi1>, vector<16x32xbf16>
    %c192 = arith.constant 192 : index
    %c0_23 = arith.constant 0 : index
    %67 = vector.load %arg2[%c192, %c0_23] : memref<256x36xbf16, #tpu.memory_space<vmem>>, vector<32x36xbf16>
    %cst_24 = arith.constant dense<0.000000e+00> : vector<16x36xf32>
    %68 = tpu.matmul %66, %67, %cst_24 {dimension_numbers = #tpu.dot_dimension_numbers<[1], [0], [0], [1], [0, 0, 1, 1], [], []>} : vector<16x32xbf16>, vector<32x36xbf16>, vector<16x36xf32> -> vector<16x36xf32>
    %69 = arith.addf %59, %68 : vector<16x36xf32>
    %c3_i32_25 = arith.constant 3 : i32
    %70 = vector.broadcast %c3_i32_25 : i32 to vector<16x1xi32>
    %71 = arith.cmpi eq, %4, %70 : vector<16x1xi32>
    %c0_i32_26 = arith.constant 0 : i32
    %72 = arith.sitofp %c0_i32_26 : i32 to bf16
    %73 = vector.shape_cast %71 : vector<16x1xi1> to vector<16x1xi1>
    %74 = vector.broadcast %73 : vector<16x1xi1> to vector<16x32xi1>
    %75 = vector.broadcast %72 : bf16 to vector<16x32xbf16>
    %76 = arith.select %74, %1, %75 : vector<16x32xi1>, vector<16x32xbf16>
    %c96 = arith.constant 96 : index
    %c0_27 = arith.constant 0 : index
    %77 = vector.load %arg2[%c96, %c0_27] : memref<256x36xbf16, #tpu.memory_space<vmem>>, vector<32x36xbf16>
    %cst_28 = arith.constant dense<0.000000e+00> : vector<16x36xf32>
    %78 = tpu.matmul %76, %77, %cst_28 {dimension_numbers = #tpu.dot_dimension_numbers<[1], [0], [0], [1], [0, 0, 1, 1], [], []>} : vector<16x32xbf16>, vector<32x36xbf16>, vector<16x36xf32> -> vector<16x36xf32>
    %79 = arith.addf %69, %78 : vector<16x36xf32>
    %c3_i32_29 = arith.constant 3 : i32
    %80 = vector.broadcast %c3_i32_29 : i32 to vector<16x1xi32>
    %81 = arith.cmpi eq, %8, %80 : vector<16x1xi32>
    %c0_i32_30 = arith.constant 0 : i32
    %82 = arith.sitofp %c0_i32_30 : i32 to bf16
    %83 = vector.shape_cast %81 : vector<16x1xi1> to vector<16x1xi1>
    %84 = vector.broadcast %83 : vector<16x1xi1> to vector<16x32xi1>
    %85 = vector.broadcast %82 : bf16 to vector<16x32xbf16>
    %86 = arith.select %84, %1, %85 : vector<16x32xi1>, vector<16x32xbf16>
    %c224 = arith.constant 224 : index
    %c0_31 = arith.constant 0 : index
    %87 = vector.load %arg2[%c224, %c0_31] : memref<256x36xbf16, #tpu.memory_space<vmem>>, vector<32x36xbf16>
    %cst_32 = arith.constant dense<0.000000e+00> : vector<16x36xf32>
    %88 = tpu.matmul %86, %87, %cst_32 {dimension_numbers = #tpu.dot_dimension_numbers<[1], [0], [0], [1], [0, 0, 1, 1], [], []>} : vector<16x32xbf16>, vector<32x36xbf16>, vector<16x36xf32> -> vector<16x36xf32>
    %89 = arith.addf %79, %88 : vector<16x36xf32>
    %c0_33 = arith.constant 0 : index
    %c0_34 = arith.constant 0 : index
    %90 = vector.load %arg3[%c0_33, %c0_34] : memref<16x36xf32, #tpu.memory_space<vmem>>, vector<16x36xf32>
    tpu.vector_store %arg3[%c0_33, %c0_34], %89 {strides = array<i32>} : memref<16x36xf32, #tpu.memory_space<vmem>>, vector<16x36xf32>,
    return
  }
  func.func @transform_0(%arg0: i32) -> (i32, i32) {
    %c0_i32 = arith.constant 0 : i32
    %c0_i32_0 = arith.constant 0 : i32
    return %arg0, %c0_i32 : i32, i32
  }
  func.func @transform_1(%arg0: i32) -> (i32, i32) {
    %c0_i32 = arith.constant 0 : i32
    %c0_i32_0 = arith.constant 0 : i32
    %c0_i32_1 = arith.constant 0 : i32
    return %c0_i32, %c0_i32_0 : i32, i32
  }
  func.func @transform_2(%arg0: i32) -> (i32, i32) {
    %c0_i32 = arith.constant 0 : i32
    %c0_i32_0 = arith.constant 0 : i32
    return %arg0, %c0_i32 : i32, i32
  }
}

</mosaic_0001>

<llo_original>
// kernel: tpu_custom_call.1
$region0: #{tpu_custom_call.1}
  #allocation0 [shape = 'u32[]', space=smem, size = 0x4, offset = 0x4, fixed_abs, tag = 'smem constant byte address 0x4 - core index']
  #allocation1 [shape = 'u32[144,128]{1,0:T(1,128)}', space=vmem, size = 0x12000, scoped, tag = 'internal scratch']
  %s0 = inlined_call_operand.vmem [shape: f32[32,32], index: 0, kind: input, shape index: {}]
  %s1 = inlined_call_operand.vmem [shape: bf16[256,36], index: 1, kind: input, shape index: {}]
  %s2 = inlined_call_operand.hbm [shape: f32[32,36], index: 2, kind: output, shape index: {}]
  %s3 = sld [smem:[#allocation0]]
  $region41: #{tpu_custom_call.1} parent=0
    _
  %s5 = ssub.s32 1, %s3
  %s6 = scalar_select 0, %s5, %s3
  $region1: #{tpu_custom_call.1} parent=0
    #allocation2 [shape = 'u8[16384]{0}', space=vmem, size = 0x4000, scoped, tag = 'output window, operand 0']
    #allocation3 [shape = 's32[2]{0}', space=sflag, size = 0x8, scoped, tag = 'scoped memory for tpu_custom_call.1']
    %7 = vsyncpa [#allocation3], 0
    %s8 = scalar_lea.sflag [#allocation3], 1
    %9 = vsyncpa %s8, 0
    loop: start=0, step=1, limit=4
    $region2: #{tpu_custom_call.1} parent=1 // loop_pre_header
      _
    $region3: #{tpu_custom_call.1} parent=1 // loop_header
      %s11 = sphi 0, %s15
      %p12 = scmp.ge.s32.totalorder %s11, 4
      %s21 = sphi 0, %s23
      %s24 = sphi 0, %s21
      %s25 = sphi 0, %s24
      %s41 = sphi 0, %s25
      %s45 = sphi 0, %s45
      %s47 = sphi 0, %s45
      %s48 = sphi 0, %s47
      %s62 = sphi 0, %s48
      %s68 = sphi 0, %s70
      %s71 = sphi 0, %s68
      %s72 = sphi 0, %s71
      %s88 = sphi 0, %s72
    $region4: #{tpu_custom_call.1} parent=1 // loop_header_branch
      %14 = sbr.rel (%p12) target = $region8
    $region5: #{tpu_custom_call.1} parent=1 // loop_body
      %s16 = ssub.s32 %s11, 1
      %s17 = ssub.s32 %s11, 2
      %s18 = sadd.s32 %s11, 1
      %s19 = ssub.s32 %s11, %s18
      %p20 = scmp.eq.s32.totalorder %s19, 0
      %s22 = sadd.s32 %s21, 1
      %s23 = scalar_select %p20, %s21, %s22
      %p26 = pneg %p20
      %p27 = scmp.eq.s32.totalorder %s11, 1
      %p28 = por %p26, %p27
      %p29 = scmp.ne.s32.totalorder %s21, %s24
      %p30 = scmp.eq.s32.totalorder %s11, 0
      %p31 = por %p29, %p30
      %p32 = scmp.ne.s32.totalorder %s21, %s24
      %p33 = scmp.eq.s32.totalorder %s16, 1
      %p34 = por %p32, %p33
      %p35 = scmp.ne.s32.totalorder %s24, %s25
      %p36 = scmp.eq.s32.totalorder %s16, 0
      %p37 = por %p35, %p36
      %p38 = scmp.ne.s32.totalorder %s24, %s25
      %p39 = scmp.eq.s32.totalorder %s17, 1
      %p40 = por %p38, %p39
      %p42 = scmp.ne.s32.totalorder %s25, %s41
      %p43 = scmp.eq.s32.totalorder %s17, 0
      %p44 = por %p42, %p43
      %s46 = sadd.s32 %s45, 1
      %p49 = scmp.eq.s32.totalorder %s11, 1
      %p50 = scmp.ne.s32.totalorder %s45, %s47
      %p51 = scmp.eq.s32.totalorder %s11, 0
      %p52 = por %p50, %p51
      %p53 = scmp.ne.s32.totalorder %s45, %s47
      %p54 = scmp.eq.s32.totalorder %s16, 1
      %p55 = por %p53, %p54
      %p56 = scmp.ne.s32.totalorder %s47, %s48
      %p57 = scmp.eq.s32.totalorder %s16, 0
      %p58 = por %p56, %p57
      %p59 = scmp.ne.s32.totalorder %s47, %s48
      %p60 = scmp.eq.s32.totalorder %s17, 1
      %p61 = por %p59, %p60
      %p63 = scmp.ne.s32.totalorder %s48, %s62
      %p64 = scmp.eq.s32.totalorder %s17, 0
      %p65 = por %p63, %p64
      %s66 = ssub.s32 %s11, %s18
      %p67 = scmp.eq.s32.totalorder %s66, 0
      %s69 = sadd.s32 %s68, 1
      %s70 = scalar_select %p67, %s68, %s69
      %p73 = pneg %p67
      %p74 = scmp.eq.s32.totalorder %s11, 1
      %p75 = por %p73, %p74
      %p76 = scmp.ne.s32.totalorder %s68, %s71
      %p77 = scmp.eq.s32.totalorder %s11, 0
      %p78 = por %p76, %p77
      %p79 = scmp.ne.s32.totalorder %s68, %s71
      %p80 = scmp.eq.s32.totalorder %s16, 1
      %p81 = por %p79, %p80
      %p82 = scmp.ne.s32.totalorder %s71, %s72
      %p83 = scmp.eq.s32.totalorder %s16, 0
      %p84 = por %p82, %p83
      %p85 = scmp.ne.s32.totalorder %s71, %s72
      %p86 = scmp.eq.s32.totalorder %s17, 1
      %p87 = por %p85, %p86
      %p89 = scmp.ne.s32.totalorder %s72, %s88
      %p90 = scmp.eq.s32.totalorder %s17, 0
      %p91 = por %p89, %p90
      %p92 = scmp.le.s32.totalorder 1, %s11
      %p93 = scmp.lt.s32.totalorder %s11, 3
      %p94 = pnand %p92, %p93
      %p95 = pneg %p94
      // Predicated region
      $region9: #{tpu_custom_call.1} parent=5 // pred_check
        _
      $region10: #{tpu_custom_call.1} parent=5 // pred_check_branch
        %97 = sbr.rel (%p94) target = $region12
      $region11: #{tpu_custom_call.1} parent=5 // pred_region
        %s98 = ssub.s32 %s11, 1
        // Predicated region
        $region13: #{tpu_custom_call.1} parent=11 // pred_check
          %p99 = pneg %p58
        $region14: #{tpu_custom_call.1} parent=11 // pred_check_branch
          %101 = sbr.rel (%p99) target = $region16
        $region15: #{tpu_custom_call.1} parent=11 // pred_region
          _
        $region16: #{tpu_custom_call.1} parent=11 // pred_fallthru
          _
      $region12: #{tpu_custom_call.1} parent=5 // pred_fallthru
        _
      %p102 = scmp.lt.s32.totalorder %s11, 2
      // Predicated region
      $region17: #{tpu_custom_call.1} parent=5 // pred_check
        %p103 = pneg %p102
      $region18: #{tpu_custom_call.1} parent=5 // pred_check_branch
        %105 = sbr.rel (%p103) target = $region20
      $region19: #{tpu_custom_call.1} parent=5 // pred_region
        // Predicated region
        $region21: #{tpu_custom_call.1} parent=19 // pred_check
          %p106 = pneg %p31
        $region22: #{tpu_custom_call.1} parent=19 // pred_check_branch
          %108 = sbr.rel (%p106) target = $region24
        $region23: #{tpu_custom_call.1} parent=19 // pred_region
          %s109 = smul.u32 2, %s11
          %p110 = scmp.lt.s32.totalorder %s109, 3
          %s111 = scalar_select %p110, %s109, 3
          %s112 = smul.addr %s111, 8
          %s113 = scalar_lea.vmem %s0, %s112
          %s114 = smul.u32 2, %s11
        $region24: #{tpu_custom_call.1} parent=19 // pred_fallthru
          _
      $region20: #{tpu_custom_call.1} parent=5 // pred_fallthru
        _
      %p115 = scmp.le.s32.totalorder 1, %s11
      %p116 = scmp.lt.s32.totalorder %s11, 3
      %p117 = pnand %p115, %p116
      %p118 = pneg %p117
      // Predicated region
      $region25: #{tpu_custom_call.1} parent=5 // pred_check
        _
      $region26: #{tpu_custom_call.1} parent=5 // pred_check_branch
        %120 = sbr.rel (%p117) target = $region28
      $region27: #{tpu_custom_call.1} parent=5 // pred_region
        %s121 = ssub.s32 %s11, 1
        %s122 = smul.u32 2, %s16
        %p123 = scmp.lt.s32.totalorder %s122, 3
        %s124 = scalar_select %p123, %s122, 3
        %s125 = smul.addr %s124, 8
        %s126 = scalar_lea.vmem %s0, %s125
        %p127 = pneg %p37
        %p128 = pneg %p34
        %p129 = pneg %p58
        %p130 = pneg %p55
        %p131 = pneg %p84
        %p132 = pneg %p81
        %s133 = sand.u32 %s71, 1
        %s134 = scalar_lea.sflag [#allocation3], %s133
        %s135 = sand.u32 %s71, 1
        %s136 = smul.addr %s135, 16
        %s137 = scalar_lea.vmem [#allocation2], %s136
        %s138 = smul.u32 2, %s16
        %p139 = scmp.lt.s32.totalorder %s138, 3
        %s140 = scalar_select %p139, %s138, 3
        %s141 = smul.addr %s140, 8
        %s142 = scalar_lea.vmem %s0, %s141
        %s143 = smul.u32 2, %s16
        %s144 = smul.u32 2, %s16
        %v148 = vld [vmem:[%s142] sm:$0xff]
        %v149 = vld [vmem:[%s142 + $0x8] sm:$0xff]
        %v150 = vpack.c.bf16 %v149, %v148
        %v151 = vlaneseq
        %v152 = vshrl.u32 %v151, 7
        %v153 = vadd.s32 %v152, 8
        %v154 = vand.u32 %v152, 3
        %v155 = vand.u32 %v153, 3
        %v156 = vshra.s32 %v152, 2
        %v157 = vshra.s32 %v153, 2
        %v158 = vand.u32 %v156, 3
        %v159 = vand.u32 %v157, 3
        %vm160 = vcmp.eq.s32.totalorder %v154, 0
        %vm161 = vcmp.eq.s32.totalorder %v155, 0
        %v162 = vsel %vm160, 1, 0
        %v163 = vsel %vm161, 1, 0
        %vm164 = vcmp.eq.s32.totalorder %v162, 1
        %vm165 = vcmp.eq.s32.totalorder %v163, 1
        %vm166 = vmpackc.low %vm164, %vm164
        %vm167 = vmpackc.low %vm165, %vm165
        %v168 = vsel %vm166, 65537, 0
        %v169 = vsel %vm167, 65537, 0
        %v170 = vunpack.c.l.b16 %v168
        %v171 = vunpack.c.l.b16 %v169
        %v172 = vpack.c.b16 %v171, %v170
        %vm173 = vcmp.ne.s16.totalorder %v172, 0
        %v174 = vsel %vm173, %v150, 0
        %v175 = vld [vmem:[%s1] sm:$0xf]
        %v176 = vld [vmem:[%s1 + $0x4] sm:$0xf]
        %v177 = vld [vmem:[%s1 + $0x8] sm:$0xf]
        %v178 = vld [vmem:[%s1 + $0xc] sm:$0xf]
        %vm179 = vcmp.eq.s32.totalorder %v158, 0
        %vm180 = vcmp.eq.s32.totalorder %v159, 0
        %v181 = vsel %vm179, 1, 0
        %v182 = vsel %vm180, 1, 0
        %vm183 = vcmp.eq.s32.totalorder %v181, 1
        %vm184 = vcmp.eq.s32.totalorder %v182, 1
        %vm185 = vmpackc.low %vm183, %vm183
        %vm186 = vmpackc.low %vm184, %vm184
        %v187 = vsel %vm185, 65537, 0
        %v188 = vsel %vm186, 65537, 0
        %v189 = vunpack.c.l.b16 %v187
        %v190 = vunpack.c.l.b16 %v188
        %v191 = vpack.c.b16 %v190, %v189
        %vm192 = vcmp.ne.s16.totalorder %v191, 0
        %v193 = vsel %vm192, %v150, 0
        %v194 = vld [vmem:[%s1 + $0x40] sm:$0xf]
        %v195 = vld [vmem:[%s1 + $0x44] sm:$0xf]
        %v196 = vld [vmem:[%s1 + $0x48] sm:$0xf]
        %v197 = vld [vmem:[%s1 + $0x4c] sm:$0xf]
        %v202 = vunpack.c.l.b16 %v194
        %v203 = vunpack.c.l.b16 %v195
        %v204 = vunpack.c.l.b16 %v196
        %v205 = vunpack.c.l.b16 %v197
        %v206 = vpack.c.b16 %v203, %v202
        %v207 = vpack.c.b16 %v205, %v204
        %vm210 = vcmask 261120
        %v212 = vsel %vm210, %v193, 0
        %214 = vmatprep.subr.bf16.mxu0 0
        %215 = vmatpush1.bf16.msra.mxu0 %v206
        %216 = vmatprep.subr.bf16.mxu0 0
        %217 = vmatpush1.bf16.msra.mxu0 %v207
        %218 = vmatprep.subr.bf16.mxu0 0
        %219 = vmatpush1.bf16.msra.mxu0 0
        %220 = vmatprep.subr.bf16.mxu0 0
        %221 = vmatpush1.bf16.msra.mxu0 0
        %222 = vmatprep.subr.bf16.mxu0 0
        %223 = vmatpush1.bf16.msra.mxu0 0
        %224 = vmatprep.subr.bf16.mxu0 0
        %225 = vmatpush1.bf16.msra.mxu0 0
        %226 = vmatprep.subr.bf16.mxu0 0
        %227 = vmatpush1.bf16.msra.mxu0 0
        %228 = vmatprep.subr.bf16.mxu0 0
        %229 = vmatpush1.bf16.msra.mxu0 0
        %230 = vmatprep.subr.bf16.mxu0 0
        %231 = vmatpush1.bf16.msra.mxu0 0
        %232 = vmatprep.subr.bf16.mxu0 0
        %233 = vmatpush1.bf16.msra.mxu0 0
        %234 = vmatprep.subr.bf16.mxu0 0
        %235 = vmatpush1.bf16.msra.mxu0 0
        %236 = vmatprep.subr.bf16.mxu0 0
        %237 = vmatpush1.bf16.msra.mxu0 0
        %238 = vmatprep.subr.bf16.mxu0 0
        %239 = vmatpush1.bf16.msra.mxu0 0
        %240 = vmatprep.subr.bf16.mxu0 0
        %241 = vmatpush1.bf16.msra.mxu0 0
        %242 = vmatprep.subr.bf16.mxu0 0
        %243 = vmatpush1.bf16.msra.mxu0 0
        %244 = vmatprep.subr.bf16.mxu0 0
        %245 = vmatpush1.bf16.msra.mxu0 0
        %246 = vmatprep.mubr.bf16.mxu0 0
        %247 = vmatmul.mubr.bf16.gmra.mrb[0].mxu0 %v212
        %v248 = vpop.f32.mrb[0].mxu0
        %v249 = vadd.f32 0.0, %v248
        %v250 = vpop.f32.mrb[0].mxu0
        %v251 = vpop.f32.mrb[0].mxu0
        %v252 = vadd.f32 0.0, %v251
        %v253 = vpop.f32.mrb[0].mxu0
        %254 = vdwg.mxu0
        %v259 = vunpack.c.l.b16 %v175
        %v260 = vunpack.c.l.b16 %v176
        %v261 = vunpack.c.l.b16 %v177
        %v262 = vunpack.c.l.b16 %v178
        %v263 = vpack.c.b16 %v260, %v259
        %v264 = vpack.c.b16 %v262, %v261
        %v268 = vsel %vm210, %v174, 0
        %270 = vmatprep.subr.bf16.mxu0 0
        %271 = vmatpush1.bf16.msra.mxu0 %v263
        %272 = vmatprep.subr.bf16.mxu0 0
        %273 = vmatpush1.bf16.msra.mxu0 %v264
        %274 = vmatprep.subr.bf16.mxu0 0
        %275 = vmatpush1.bf16.msra.mxu0 0
        %276 = vmatprep.subr.bf16.mxu0 0
        %277 = vmatpush1.bf16.msra.mxu0 0
        %278 = vmatprep.subr.bf16.mxu0 0
        %279 = vmatpush1.bf16.msra.mxu0 0
        %280 = vmatprep.subr.bf16.mxu0 0
        %281 = vmatpush1.bf16.msra.mxu0 0
        %282 = vmatprep.subr.bf16.mxu0 0
        %283 = vmatpush1.bf16.msra.mxu0 0
        %284 = vmatprep.subr.bf16.mxu0 0
        %285 = vmatpush1.bf16.msra.mxu0 0
        %286 = vmatprep.subr.bf16.mxu0 0
        %287 = vmatpush1.bf16.msra.mxu0 0
        %288 = vmatprep.subr.bf16.mxu0 0
        %289 = vmatpush1.bf16.msra.mxu0 0
        %290 = vmatprep.subr.bf16.mxu0 0
        %291 = vmatpush1.bf16.msra.mxu0 0
        %292 = vmatprep.subr.bf16.mxu0 0
        %293 = vmatpush1.bf16.msra.mxu0 0
        %294 = vmatprep.subr.bf16.mxu0 0
        %295 = vmatpush1.bf16.msra.mxu0 0
        %296 = vmatprep.subr.bf16.mxu0 0
        %297 = vmatpush1.bf16.msra.mxu0 0
        %298 = vmatprep.subr.bf16.mxu0 0
        %299 = vmatpush1.bf16.msra.mxu0 0
        %300 = vmatprep.subr.bf16.mxu0 0
        %301 = vmatpush1.bf16.msra.mxu0 0
        %302 = vmatprep.mubr.bf16.mxu0 0
        %303 = vmatmul.mubr.bf16.gmra.mrb[0].mxu0 %v268
        %v304 = vpop.f32.mrb[0].mxu0
        %v305 = vadd.f32 %v249, %v304
        %v306 = vpop.f32.mrb[0].mxu0
        %v307 = vpop.f32.mrb[0].mxu0
        %v308 = vadd.f32 %v252, %v307
        %v309 = vpop.f32.mrb[0].mxu0
        %310 = vdwg.mxu0
        %vm311 = vcmp.eq.s32.totalorder %v154, 1
        %vm312 = vcmp.eq.s32.totalorder %v155, 1
        %v313 = vsel %vm311, 1, 0
        %v314 = vsel %vm312, 1, 0
        %vm315 = vcmp.eq.s32.totalorder %v313, 1
        %vm316 = vcmp.eq.s32.totalorder %v314, 1
        %vm317 = vmpackc.low %vm315, %vm315
        %vm318 = vmpackc.low %vm316, %vm316
        %v319 = vsel %vm317, 65537, 0
        %v320 = vsel %vm318, 65537, 0
        %v321 = vunpack.c.l.b16 %v319
        %v322 = vunpack.c.l.b16 %v320
        %v323 = vpack.c.b16 %v322, %v321
        %vm324 = vcmp.ne.s16.totalorder %v323, 0
        %v325 = vsel %vm324, %v150, 0
        %v326 = vld [vmem:[%s1 + $0x10] sm:$0xf]
        %v327 = vld [vmem:[%s1 + $0x14] sm:$0xf]
        %v328 = vld [vmem:[%s1 + $0x18] sm:$0xf]
        %v329 = vld [vmem:[%s1 + $0x1c] sm:$0xf]
        %v334 = vunpack.c.l.b16 %v326
        %v335 = vunpack.c.l.b16 %v327
        %v336 = vunpack.c.l.b16 %v328
        %v337 = vunpack.c.l.b16 %v329
        %v338 = vpack.c.b16 %v335, %v334
        %v339 = vpack.c.b16 %v337, %v336
        %v343 = vsel %vm210, %v325, 0
        %345 = vmatprep.subr.bf16.mxu0 0
        %346 = vmatpush1.bf16.msra.mxu0 %v338
        %347 = vmatprep.subr.bf16.mxu0 0
        %348 = vmatpush1.bf16.msra.mxu0 %v339
        %349 = vmatprep.subr.bf16.mxu0 0
        %350 = vmatpush1.bf16.msra.mxu0 0
        %351 = vmatprep.subr.bf16.mxu0 0
        %352 = vmatpush1.bf16.msra.mxu0 0
        %353 = vmatprep.subr.bf16.mxu0 0
        %354 = vmatpush1.bf16.msra.mxu0 0
        %355 = vmatprep.subr.bf16.mxu0 0
        %356 = vmatpush1.bf16.msra.mxu0 0
        %357 = vmatprep.subr.bf16.mxu0 0
        %358 = vmatpush1.bf16.msra.mxu0 0
        %359 = vmatprep.subr.bf16.mxu0 0
        %360 = vmatpush1.bf16.msra.mxu0 0
        %361 = vmatprep.subr.bf16.mxu0 0
        %362 = vmatpush1.bf16.msra.mxu0 0
        %363 = vmatprep.subr.bf16.mxu0 0
        %364 = vmatpush1.bf16.msra.mxu0 0
        %365 = vmatprep.subr.bf16.mxu0 0
        %366 = vmatpush1.bf16.msra.mxu0 0
        %367 = vmatprep.subr.bf16.mxu0 0
        %368 = vmatpush1.bf16.msra.mxu0 0
        %369 = vmatprep.subr.bf16.mxu0 0
        %370 = vmatpush1.bf16.msra.mxu0 0
        %371 = vmatprep.subr.bf16.mxu0 0
        %372 = vmatpush1.bf16.msra.mxu0 0
        %373 = vmatprep.subr.bf16.mxu0 0
        %374 = vmatpush1.bf16.msra.mxu0 0
        %375 = vmatprep.subr.bf16.mxu0 0
        %376 = vmatpush1.bf16.msra.mxu0 0
        %377 = vmatprep.mubr.bf16.mxu0 0
        %378 = vmatmul.mubr.bf16.gmra.mrb[0].mxu0 %v343
        %v379 = vpop.f32.mrb[0].mxu0
        %v380 = vadd.f32 0.0, %v379
        %v381 = vpop.f32.mrb[0].mxu0
        %v382 = vpop.f32.mrb[0].mxu0
        %v383 = vadd.f32 0.0, %v382
        %v384 = vpop.f32.mrb[0].mxu0
        %385 = vdwg.mxu0
        %v386 = vadd.f32 %v305, %v380
        %v387 = vadd.f32 %v308, %v383
        %vm388 = vcmp.eq.s32.totalorder %v158, 1
        %vm389 = vcmp.eq.s32.totalorder %v159, 1
        %v390 = vsel %vm388, 1, 0
        %v391 = vsel %vm389, 1, 0
        %vm392 = vcmp.eq.s32.totalorder %v390, 1
        %vm393 = vcmp.eq.s32.totalorder %v391, 1
        %vm394 = vmpackc.low %vm392, %vm392
        %vm395 = vmpackc.low %vm393, %vm393
        %v396 = vsel %vm394, 65537, 0
        %v397 = vsel %vm395, 65537, 0
        %v398 = vunpack.c.l.b16 %v396
        %v399 = vunpack.c.l.b16 %v397
        %v400 = vpack.c.b16 %v399, %v398
        %vm401 = vcmp.ne.s16.totalorder %v400, 0
        %v402 = vsel %vm401, %v150, 0
        %v403 = vld [vmem:[%s1 + $0x50] sm:$0xf]
        %v404 = vld [vmem:[%s1 + $0x54] sm:$0xf]
        %v405 = vld [vmem:[%s1 + $0x58] sm:$0xf]
        %v406 = vld [vmem:[%s1 + $0x5c] sm:$0xf]
        %v411 = vunpack.c.l.b16 %v403
        %v412 = vunpack.c.l.b16 %v404
        %v413 = vunpack.c.l.b16 %v405
        %v414 = vunpack.c.l.b16 %v406
        %v415 = vpack.c.b16 %v412, %v411
        %v416 = vpack.c.b16 %v414, %v413
        %v420 = vsel %vm210, %v402, 0
        %422 = vmatprep.subr.bf16.mxu0 0
        %423 = vmatpush1.bf16.msra.mxu0 %v415
        %424 = vmatprep.subr.bf16.mxu0 0
        %425 = vmatpush1.bf16.msra.mxu0 %v416
        %426 = vmatprep.subr.bf16.mxu0 0
        %427 = vmatpush1.bf16.msra.mxu0 0
        %428 = vmatprep.subr.bf16.mxu0 0
        %429 = vmatpush1.bf16.msra.mxu0 0
        %430 = vmatprep.subr.bf16.mxu0 0
        %431 = vmatpush1.bf16.msra.mxu0 0
        %432 = vmatprep.subr.bf16.mxu0 0
        %433 = vmatpush1.bf16.msra.mxu0 0
        %434 = vmatprep.subr.bf16.mxu0 0
        %435 = vmatpush1.bf16.msra.mxu0 0
        %436 = vmatprep.subr.bf16.mxu0 0
        %437 = vmatpush1.bf16.msra.mxu0 0
        %438 = vmatprep.subr.bf16.mxu0 0
        %439 = vmatpush1.bf16.msra.mxu0 0
        %440 = vmatprep.subr.bf16.mxu0 0
        %441 = vmatpush1.bf16.msra.mxu0 0
        %442 = vmatprep.subr.bf16.mxu0 0
        %443 = vmatpush1.bf16.msra.mxu0 0
        %444 = vmatprep.subr.bf16.mxu0 0
        %445 = vmatpush1.bf16.msra.mxu0 0
        %446 = vmatprep.subr.bf16.mxu0 0
        %447 = vmatpush1.bf16.msra.mxu0 0
        %448 = vmatprep.subr.bf16.mxu0 0
        %449 = vmatpush1.bf16.msra.mxu0 0
        %450 = vmatprep.subr.bf16.mxu0 0
        %451 = vmatpush1.bf16.msra.mxu0 0
        %452 = vmatprep.subr.bf16.mxu0 0
        %453 = vmatpush1.bf16.msra.mxu0 0
        %454 = vmatprep.mubr.bf16.mxu0 0
        %455 = vmatmul.mubr.bf16.gmra.mrb[0].mxu0 %v420
        %v456 = vpop.f32.mrb[0].mxu0
        %v457 = vadd.f32 0.0, %v456
        %v458 = vpop.f32.mrb[0].mxu0
        %v459 = vpop.f32.mrb[0].mxu0
        %v460 = vadd.f32 0.0, %v459
        %v461 = vpop.f32.mrb[0].mxu0
        %462 = vdwg.mxu0
        %v463 = vadd.f32 %v386, %v457
        %v464 = vadd.f32 %v387, %v460
        %vm465 = vcmp.eq.s32.totalorder %v154, 2
        %vm466 = vcmp.eq.s32.totalorder %v155, 2
        %v467 = vsel %vm465, 1, 0
        %v468 = vsel %vm466, 1, 0
        %vm469 = vcmp.eq.s32.totalorder %v467, 1
        %vm470 = vcmp.eq.s32.totalorder %v468, 1
        %vm471 = vmpackc.low %vm469, %vm469
        %vm472 = vmpackc.low %vm470, %vm470
        %v473 = vsel %vm471, 65537, 0
        %v474 = vsel %vm472, 65537, 0
        %v475 = vunpack.c.l.b16 %v473
        %v476 = vunpack.c.l.b16 %v474
        %v477 = vpack.c.b16 %v476, %v475
        %vm478 = vcmp.ne.s16.totalorder %v477, 0
        %v479 = vsel %vm478, %v150, 0
        %v480 = vld [vmem:[%s1 + $0x20] sm:$0xf]
        %v481 = vld [vmem:[%s1 + $0x24] sm:$0xf]
        %v482 = vld [vmem:[%s1 + $0x28] sm:$0xf]
        %v483 = vld [vmem:[%s1 + $0x2c] sm:$0xf]
        %v488 = vunpack.c.l.b16 %v480
        %v489 = vunpack.c.l.b16 %v481
        %v490 = vunpack.c.l.b16 %v482
        %v491 = vunpack.c.l.b16 %v483
        %v492 = vpack.c.b16 %v489, %v488
        %v493 = vpack.c.b16 %v491, %v490
        %v497 = vsel %vm210, %v479, 0
        %499 = vmatprep.subr.bf16.mxu0 0
        %500 = vmatpush1.bf16.msra.mxu0 %v492
        %501 = vmatprep.subr.bf16.mxu0 0
        %502 = vmatpush1.bf16.msra.mxu0 %v493
        %503 = vmatprep.subr.bf16.mxu0 0
        %504 = vmatpush1.bf16.msra.mxu0 0
        %505 = vmatprep.subr.bf16.mxu0 0
        %506 = vmatpush1.bf16.msra.mxu0 0
        %507 = vmatprep.subr.bf16.mxu0 0
        %508 = vmatpush1.bf16.msra.mxu0 0
        %509 = vmatprep.subr.bf16.mxu0 0
        %510 = vmatpush1.bf16.msra.mxu0 0
        %511 = vmatprep.subr.bf16.mxu0 0
        %512 = vmatpush1.bf16.msra.mxu0 0
        %513 = vmatprep.subr.bf16.mxu0 0
        %514 = vmatpush1.bf16.msra.mxu0 0
        %515 = vmatprep.subr.bf16.mxu0 0
        %516 = vmatpush1.bf16.msra.mxu0 0
        %517 = vmatprep.subr.bf16.mxu0 0
        %518 = vmatpush1.bf16.msra.mxu0 0
        %519 = vmatprep.subr.bf16.mxu0 0
        %520 = vmatpush1.bf16.msra.mxu0 0
        %521 = vmatprep.subr.bf16.mxu0 0
        %522 = vmatpush1.bf16.msra.mxu0 0
        %523 = vmatprep.subr.bf16.mxu0 0
        %524 = vmatpush1.bf16.msra.mxu0 0
        %525 = vmatprep.subr.bf16.mxu0 0
        %526 = vmatpush1.bf16.msra.mxu0 0
        %527 = vmatprep.subr.bf16.mxu0 0
        %528 = vmatpush1.bf16.msra.mxu0 0
        %529 = vmatprep.subr.bf16.mxu0 0
        %530 = vmatpush1.bf16.msra.mxu0 0
        %531 = vmatprep.mubr.bf16.mxu0 0
        %532 = vmatmul.mubr.bf16.gmra.mrb[0].mxu0 %v497
        %v533 = vpop.f32.mrb[0].mxu0
        %v534 = vadd.f32 0.0, %v533
        %v535 = vpop.f32.mrb[0].mxu0
        %v536 = vpop.f32.mrb[0].mxu0
        %v537 = vadd.f32 0.0, %v536
        %v538 = vpop.f32.mrb[0].mxu0
        %539 = vdwg.mxu0
        %v540 = vadd.f32 %v463, %v534
        %v541 = vadd.f32 %v464, %v537
        %vm542 = vcmp.eq.s32.totalorder %v158, 2
        %vm543 = vcmp.eq.s32.totalorder %v159, 2
        %v544 = vsel %vm542, 1, 0
        %v545 = vsel %vm543, 1, 0
        %vm546 = vcmp.eq.s32.totalorder %v544, 1
        %vm547 = vcmp.eq.s32.totalorder %v545, 1
        %vm548 = vmpackc.low %vm546, %vm546
        %vm549 = vmpackc.low %vm547, %vm547
        %v550 = vsel %vm548, 65537, 0
        %v551 = vsel %vm549, 65537, 0
        %v552 = vunpack.c.l.b16 %v550
        %v553 = vunpack.c.l.b16 %v551
        %v554 = vpack.c.b16 %v553, %v552
        %vm555 = vcmp.ne.s16.totalorder %v554, 0
        %v556 = vsel %vm555, %v150, 0
        %v557 = vld [vmem:[%s1 + $0x60] sm:$0xf]
        %v558 = vld [vmem:[%s1 + $0x64] sm:$0xf]
        %v559 = vld [vmem:[%s1 + $0x68] sm:$0xf]
        %v560 = vld [vmem:[%s1 + $0x6c] sm:$0xf]
        %v565 = vunpack.c.l.b16 %v557
        %v566 = vunpack.c.l.b16 %v558
        %v567 = vunpack.c.l.b16 %v559
        %v568 = vunpack.c.l.b16 %v560
        %v569 = vpack.c.b16 %v566, %v565
        %v570 = vpack.c.b16 %v568, %v567
        %v574 = vsel %vm210, %v556, 0
        %576 = vmatprep.subr.bf16.mxu0 0
        %577 = vmatpush1.bf16.msra.mxu0 %v569
        %578 = vmatprep.subr.bf16.mxu0 0
        %579 = vmatpush1.bf16.msra.mxu0 %v570
        %580 = vmatprep.subr.bf16.mxu0 0
        %581 = vmatpush1.bf16.msra.mxu0 0
        %582 = vmatprep.subr.bf16.mxu0 0
        %583 = vmatpush1.bf16.msra.mxu0 0
        %584 = vmatprep.subr.bf16.mxu0 0
        %585 = vmatpush1.bf16.msra.mxu0 0
        %586 = vmatprep.subr.bf16.mxu0 0
        %587 = vmatpush1.bf16.msra.mxu0 0
        %588 = vmatprep.subr.bf16.mxu0 0
        %589 = vmatpush1.bf16.msra.mxu0 0
        %590 = vmatprep.subr.bf16.mxu0 0
        %591 = vmatpush1.bf16.msra.mxu0 0
        %592 = vmatprep.subr.bf16.mxu0 0
        %593 = vmatpush1.bf16.msra.mxu0 0
        %594 = vmatprep.subr.bf16.mxu0 0
        %595 = vmatpush1.bf16.msra.mxu0 0
        %596 = vmatprep.subr.bf16.mxu0 0
        %597 = vmatpush1.bf16.msra.mxu0 0
        %598 = vmatprep.subr.bf16.mxu0 0
        %599 = vmatpush1.bf16.msra.mxu0 0
        %600 = vmatprep.subr.bf16.mxu0 0
        %601 = vmatpush1.bf16.msra.mxu0 0
        %602 = vmatprep.subr.bf16.mxu0 0
        %603 = vmatpush1.bf16.msra.mxu0 0
        %604 = vmatprep.subr.bf16.mxu0 0
        %605 = vmatpush1.bf16.msra.mxu0 0
        %606 = vmatprep.subr.bf16.mxu0 0
        %607 = vmatpush1.bf16.msra.mxu0 0
        %608 = vmatprep.mubr.bf16.mxu0 0
        %609 = vmatmul.mubr.bf16.gmra.mrb[0].mxu0 %v574
        %v610 = vpop.f32.mrb[0].mxu0
        %v611 = vadd.f32 0.0, %v610
        %v612 = vpop.f32.mrb[0].mxu0
        %v613 = vpop.f32.mrb[0].mxu0
        %v614 = vadd.f32 0.0, %v613
        %v615 = vpop.f32.mrb[0].mxu0
        %616 = vdwg.mxu0
        %v617 = vadd.f32 %v540, %v611
        %v618 = vadd.f32 %v541, %v614
        %vm619 = vcmp.eq.s32.totalorder %v154, 3
        %vm620 = vcmp.eq.s32.totalorder %v155, 3
        %v621 = vsel %vm619, 1, 0
        %v622 = vsel %vm620, 1, 0
        %vm623 = vcmp.eq.s32.totalorder %v621, 1
        %vm624 = vcmp.eq.s32.totalorder %v622, 1
        %vm625 = vmpackc.low %vm623, %vm623
        %vm626 = vmpackc.low %vm624, %vm624
        %v627 = vsel %vm625, 65537, 0
        %v628 = vsel %vm626, 65537, 0
        %v629 = vunpack.c.l.b16 %v627
        %v630 = vunpack.c.l.b16 %v628
        %v631 = vpack.c.b16 %v630, %v629
        %vm632 = vcmp.ne.s16.totalorder %v631, 0
        %v633 = vsel %vm632, %v150, 0
        %v634 = vld [vmem:[%s1 + $0x30] sm:$0xf]
        %v635 = vld [vmem:[%s1 + $0x34] sm:$0xf]
        %v636 = vld [vmem:[%s1 + $0x38] sm:$0xf]
        %v637 = vld [vmem:[%s1 + $0x3c] sm:$0xf]
        %v642 = vunpack.c.l.b16 %v634
        %v643 = vunpack.c.l.b16 %v635
        %v644 = vunpack.c.l.b16 %v636
        %v645 = vunpack.c.l.b16 %v637
        %v646 = vpack.c.b16 %v643, %v642
        %v647 = vpack.c.b16 %v645, %v644
        %v651 = vsel %vm210, %v633, 0
        %653 = vmatprep.subr.bf16.mxu0 0
        %654 = vmatpush1.bf16.msra.mxu0 %v646
        %655 = vmatprep.subr.bf16.mxu0 0
        %656 = vmatpush1.bf16.msra.mxu0 %v647
        %657 = vmatprep.subr.bf16.mxu0 0
        %658 = vmatpush1.bf16.msra.mxu0 0
        %659 = vmatprep.subr.bf16.mxu0 0
        %660 = vmatpush1.bf16.msra.mxu0 0
        %661 = vmatprep.subr.bf16.mxu0 0
        %662 = vmatpush1.bf16.msra.mxu0 0
        %663 = vmatprep.subr.bf16.mxu0 0
        %664 = vmatpush1.bf16.msra.mxu0 0
        %665 = vmatprep.subr.bf16.mxu0 0
        %666 = vmatpush1.bf16.msra.mxu0 0
        %667 = vmatprep.subr.bf16.mxu0 0
        %668 = vmatpush1.bf16.msra.mxu0 0
        %669 = vmatprep.subr.bf16.mxu0 0
        %670 = vmatpush1.bf16.msra.mxu0 0
        %671 = vmatprep.subr.bf16.mxu0 0
        %672 = vmatpush1.bf16.msra.mxu0 0
        %673 = vmatprep.subr.bf16.mxu0 0
        %674 = vmatpush1.bf16.msra.mxu0 0
        %675 = vmatprep.subr.bf16.mxu0 0
        %676 = vmatpush1.bf16.msra.mxu0 0
        %677 = vmatprep.subr.bf16.mxu0 0
        %678 = vmatpush1.bf16.msra.mxu0 0
        %679 = vmatprep.subr.bf16.mxu0 0
        %680 = vmatpush1.bf16.msra.mxu0 0
        %681 = vmatprep.subr.bf16.mxu0 0
        %682 = vmatpush1.bf16.msra.mxu0 0
        %683 = vmatprep.subr.bf16.mxu0 0
        %684 = vmatpush1.bf16.msra.mxu0 0
        %685 = vmatprep.mubr.bf16.mxu0 0
        %686 = vmatmul.mubr.bf16.gmra.mrb[0].mxu0 %v651
        %v687 = vpop.f32.mrb[0].mxu0
        %v688 = vadd.f32 0.0, %v687
        %v689 = vpop.f32.mrb[0].mxu0
        %v690 = vpop.f32.mrb[0].mxu0
        %v691 = vadd.f32 0.0, %v690
        %v692 = vpop.f32.mrb[0].mxu0
        %693 = vdwg.mxu0
        %v694 = vadd.f32 %v617, %v688
        %v695 = vadd.f32 %v618, %v691
        %vm696 = vcmp.eq.s32.totalorder %v158, 3
        %vm697 = vcmp.eq.s32.totalorder %v159, 3
        %v698 = vsel %vm696, 1, 0
        %v699 = vsel %vm697, 1, 0
        %vm700 = vcmp.eq.s32.totalorder %v698, 1
        %vm701 = vcmp.eq.s32.totalorder %v699, 1
        %vm702 = vmpackc.low %vm700, %vm700
        %vm703 = vmpackc.low %vm701, %vm701
        %v704 = vsel %vm702, 65537, 0
        %v705 = vsel %vm703, 65537, 0
        %v706 = vunpack.c.l.b16 %v704
        %v707 = vunpack.c.l.b16 %v705
        %v708 = vpack.c.b16 %v707, %v706
        %vm709 = vcmp.ne.s16.totalorder %v708, 0
        %v710 = vsel %vm709, %v150, 0
        %v711 = vld [vmem:[%s1 + $0x70] sm:$0xf]
        %v712 = vld [vmem:[%s1 + $0x74] sm:$0xf]
        %v713 = vld [vmem:[%s1 + $0x78] sm:$0xf]
        %v714 = vld [vmem:[%s1 + $0x7c] sm:$0xf]
        %v719 = vunpack.c.l.b16 %v711
        %v720 = vunpack.c.l.b16 %v712
        %v721 = vunpack.c.l.b16 %v713
        %v722 = vunpack.c.l.b16 %v714
        %v723 = vpack.c.b16 %v720, %v719
        %v724 = vpack.c.b16 %v722, %v721
        %v728 = vsel %vm210, %v710, 0
        %730 = vmatprep.subr.bf16.mxu0 0
        %731 = vmatpush1.bf16.msra.mxu0 %v723
        %732 = vmatprep.subr.bf16.mxu0 0
        %733 = vmatpush1.bf16.msra.mxu0 %v724
        %734 = vmatprep.subr.bf16.mxu0 0
        %735 = vmatpush1.bf16.msra.mxu0 0
        %736 = vmatprep.subr.bf16.mxu0 0
        %737 = vmatpush1.bf16.msra.mxu0 0
        %738 = vmatprep.subr.bf16.mxu0 0
        %739 = vmatpush1.bf16.msra.mxu0 0
        %740 = vmatprep.subr.bf16.mxu0 0
        %741 = vmatpush1.bf16.msra.mxu0 0
        %742 = vmatprep.subr.bf16.mxu0 0
        %743 = vmatpush1.bf16.msra.mxu0 0
        %744 = vmatprep.subr.bf16.mxu0 0
        %745 = vmatpush1.bf16.msra.mxu0 0
        %746 = vmatprep.subr.bf16.mxu0 0
        %747 = vmatpush1.bf16.msra.mxu0 0
        %748 = vmatprep.subr.bf16.mxu0 0
        %749 = vmatpush1.bf16.msra.mxu0 0
        %750 = vmatprep.subr.bf16.mxu0 0
        %751 = vmatpush1.bf16.msra.mxu0 0
        %752 = vmatprep.subr.bf16.mxu0 0
        %753 = vmatpush1.bf16.msra.mxu0 0
        %754 = vmatprep.subr.bf16.mxu0 0
        %755 = vmatpush1.bf16.msra.mxu0 0
        %756 = vmatprep.subr.bf16.mxu0 0
        %757 = vmatpush1.bf16.msra.mxu0 0
        %758 = vmatprep.subr.bf16.mxu0 0
        %759 = vmatpush1.bf16.msra.mxu0 0
        %760 = vmatprep.subr.bf16.mxu0 0
        %761 = vmatpush1.bf16.msra.mxu0 0
        %762 = vmatprep.mubr.bf16.mxu0 0
        %763 = vmatmul.mubr.bf16.gmra.mrb[0].mxu0 %v728
        %v764 = vpop.f32.mrb[0].mxu0
        %v765 = vadd.f32 0.0, %v764
        %v766 = vpop.f32.mrb[0].mxu0
        %v767 = vpop.f32.mrb[0].mxu0
        %v768 = vadd.f32 0.0, %v767
        %v769 = vpop.f32.mrb[0].mxu0
        %770 = vdwg.mxu0
        %v771 = vadd.f32 %v694, %v765
        %v772 = vadd.f32 %v695, %v768
        %vm773 = vcmask 293888
        %774 = vst.msk [vmem:[%s137] sm:$0xff] %vm773, %v771
        %775 = vst.msk [vmem:[%s137 + $0x8] sm:$0xff] %vm773, %v772
        %s776 = sand.u32 %s71, 1
        %s777 = scalar_lea.sflag [#allocation3], %s776
        %s778 = sand.u32 %s71, 1
        %s779 = smul.addr %s778, 16
        %s780 = scalar_lea.vmem [#allocation2], %s779
        // Predicated region
        $region29: #{tpu_custom_call.1} parent=27 // pred_check
          %p781 = pneg %p81
        $region30: #{tpu_custom_call.1} parent=27 // pred_check_branch
          %783 = sbr.rel (%p781) target = $region32
        $region31: #{tpu_custom_call.1} parent=27 // pred_region
          %s784 = smul.u32 2, %s16
          %s786 = ssub.s32 256, 256
          %787 = vsyncadd %s777, %s786
          %s788 = smul.addr %s784, 128
          %s789 = scalar_lea.hbm %s2, %s788
          %s790 = sshll.u32 %s780, 4
          %s791 = int_to_ptr.vmem [resolvable:$true] %s790
          %796 = dma.vmem_to_hbm [thread:$0]  %s791, 256, %s789, %s777, 128, 128, 8
        $region32: #{tpu_custom_call.1} parent=27 // pred_fallthru
          _
      $region28: #{tpu_custom_call.1} parent=5 // pred_fallthru
        _
      %p797 = scmp.le.s32.totalorder 2, %s11
      // Predicated region
      $region33: #{tpu_custom_call.1} parent=5 // pred_check
        %p798 = pneg %p797
      $region34: #{tpu_custom_call.1} parent=5 // pred_check_branch
        %800 = sbr.rel (%p798) target = $region36
      $region35: #{tpu_custom_call.1} parent=5 // pred_region
        %s801 = ssub.s32 %s11, 2
        // Predicated region
        $region37: #{tpu_custom_call.1} parent=35 // pred_check
          %p802 = pneg %p87
        $region38: #{tpu_custom_call.1} parent=35 // pred_check_branch
          %804 = sbr.rel (%p802) target = $region40
        $region39: #{tpu_custom_call.1} parent=35 // pred_region
          %s805 = sand.u32 %s72, 1
          %s806 = scalar_lea.sflag [#allocation3], %s805
          %s807 = sand.u32 %s72, 1
          %s808 = smul.addr %s807, 16
          %s809 = scalar_lea.vmem [#allocation2], %s808
          %810 = dma.done %s806, 256
        $region40: #{tpu_custom_call.1} parent=35 // pred_fallthru
          _
      $region36: #{tpu_custom_call.1} parent=5 // pred_fallthru
        _
    $region6: #{tpu_custom_call.1} parent=1 // loop_footer
      %s15 = sadd.s32 1, %s11
    $region7: #{tpu_custom_call.1} parent=1 // loop_footer_branch
      %10 = sbr.rel target = $region3
    $region8: #{tpu_custom_call.1} parent=1 // loop_exit
      _
    %811 = vsyncpa [#allocation3], 1
    %s812 = scalar_lea.sflag [#allocation3], 1
    %813 = vsyncpa %s812, 1

</llo_original>
